<compile_context>
chip_gen: v7x
topology: tpu7x:2x2x1
jax: 0.10.0
libtpu: 0.0.40
codegen_flags: <defaults>
</compile_context>

<pallas_src>
import jax
import jax.numpy as jnp
from jax.experimental import pallas as pl
from jax.experimental.pallas import tpu as pltpu


def _round_up(v, m):
    return (v + m - 1) // m * m


# --------------------- Stage 1: xW = x @ W (row tiled) --------------------- #
def _linear_kernel(x_ref, w_ref, o_ref):
    # bf16 x bf16 on the MXU, f32 accumulation, bf16 output feeds stage 2.
    o_ref[...] = jnp.dot(
        x_ref[...], w_ref[...], preferred_element_type=jnp.float32
    ).astype(o_ref.dtype)


def _linear(x_bf, w_bf, *, tm):
    n, h = x_bf.shape
    return pl.pallas_call(
        _linear_kernel,
        out_shape=jax.ShapeDtypeStruct((n, h), jnp.bfloat16),
        grid=(n // tm,),
        in_specs=[
            pl.BlockSpec((tm, h), lambda i: (i, 0)),   # x row tile (streamed)
            pl.BlockSpec((h, h), lambda i: (0, 0)),    # W (resident)
        ],
        out_specs=pl.BlockSpec((tm, h), lambda i: (i, 0)),
        compiler_params=pltpu.CompilerParams(
            dimension_semantics=("parallel",),
            vmem_limit_bytes=64 * 1024 * 1024,
        ),
    )(x_bf, w_bf)


# ------------- Stage 2: out = relu(A_norm @ xW + b), tiled M x K ----------- #
def _agg_kernel(a_ref, xw_ref, b_ref, o_ref, acc_ref):
    k = pl.program_id(1)

    @pl.when(k == 0)
    def _():
        acc_ref[...] = jnp.zeros_like(acc_ref)

    acc_ref[...] += jnp.dot(
        a_ref[...], xw_ref[...], preferred_element_type=jnp.float32
    )

    @pl.when(k == pl.num_programs(1) - 1)
    def _():
        # epilogue on the f32 accumulator (bf16 elementwise would be emulated on v5e)
        o_ref[...] = jnp.maximum(acc_ref[...] + b_ref[...], 0.0).astype(o_ref.dtype)


def _aggregate(a_bf, xw_bf, b_f32, *, tm, tk):
    n, h = xw_bf.shape
    return pl.pallas_call(
        _agg_kernel,
        out_shape=jax.ShapeDtypeStruct((n, h), jnp.float32),
        grid=(n // tm, n // tk),                          # K (reduction) axis last
        in_specs=[
            pl.BlockSpec((tm, tk), lambda i, k: (i, k)),  # A tile (streamed)
            pl.BlockSpec((tk, h), lambda i, k: (k, 0)),   # xW rows for this K tile
            pl.BlockSpec((1, h), lambda i, k: (0, 0)),    # bias (resident)
        ],
        out_specs=pl.BlockSpec((tm, h), lambda i, k: (i, 0)),
        scratch_shapes=[pltpu.VMEM((tm, h), jnp.float32)],
        compiler_params=pltpu.CompilerParams(
            # row tiles independent -> parallel (megacore on v7x); K reduction -> arbitrary
            dimension_semantics=("parallel", "arbitrary"),
            vmem_limit_bytes=64 * 1024 * 1024,
        ),
    )(a_bf, xw_bf, b_f32)


# ------------------------------ Forward wrapper ----------------------------- #
def gcn_diff_forward(a_norm, x, w, b, *, tile_m=256, tile_k=256):
    """relu(A_norm @ (x @ W) + b) with lane-dense padding + tiled Pallas kernels."""
    n, h = x.shape
    h_pad = _round_up(h, 128)
    n_pad = _round_up(n, 128)
    tm = min(tile_m, n_pad)
    tk = min(tile_k, n_pad)
    n_pad = _round_up(n_pad, max(tm, tk))   # make tiles divide evenly

    # Zero-pad to lane-dense, tile-divisible shapes (zeros contribute nothing;
    # padded output rows/cols are sliced off below).
    a_p = jnp.pad(a_norm, ((0, n_pad - n), (0, n_pad - n)))
    x_p = jnp.pad(x, ((0, n_pad - n), (0, h_pad - h)))
    w_p = jnp.pad(w, ((0, h_pad - h), (0, h_pad - h)))
    b_p = jnp.pad(b.reshape(1, h), ((0, 0), (0, h_pad - h))).astype(jnp.float32)

    # bf16 matmul operands; f32 accumulation preserved inside the kernels.
    a_bf = a_p.astype(jnp.bfloat16)
    x_bf = x_p.astype(jnp.bfloat16)
    w_bf = w_p.astype(jnp.bfloat16)

    xw = _linear(x_bf, w_bf, tm=tm)                   # [n_pad, h_pad] bf16, computed once
    out = _aggregate(a_bf, xw, b_p, tm=tm, tk=tk)     # [n_pad, h_pad] f32
    return out[:n, :h]


# ------------------------- gcn_norm (JAX glue) ----------------------------- #
def build_normalized_adjacency(edge_index, edge_weight, num_nodes):
    """Dense equivalent of PyG gcn_norm with add_self_loops=True."""
    row, col = edge_index[0], edge_index[1]
    if edge_weight is None:
        edge_weight = jnp.ones(row.shape[0], dtype=jnp.float32)

    loop_idx = jnp.arange(num_nodes, dtype=row.dtype)
    row = jnp.concatenate([row, loop_idx])
    col = jnp.concatenate([col, loop_idx])
    edge_weight = jnp.concatenate(
        [edge_weight, jnp.ones(num_nodes, dtype=jnp.float32)]
    )

    deg = jnp.zeros(num_nodes, dtype=jnp.float32).at[col].add(edge_weight)
    deg_inv_sqrt = jnp.where(deg > 0, 1.0 / jnp.sqrt(deg), 0.0)
    norm = deg_inv_sqrt[row] * edge_weight * deg_inv_sqrt[col]

    # Dense adjacency: aggregation target is col (dst), source is row (src).
    a = jnp.zeros((num_nodes, num_nodes), dtype=jnp.float32)
    a = a.at[col, row].add(norm)
    return a
    # TODO(synk): for production-scale sparse graphs replace the dense A_norm
    # matmul with a CSR gather kernel via PrefetchScalarGridSpec (row ptrs /
    # neighbor ids prefetched to SMEM) instead of streaming O(N^2) zeros.


# --------------------------------- main ------------------------------------ #
if __name__ == "__main__":
    N = 64           # number of nodes
    H = 128          # hidden_channels
    E = 256          # number of (directed) edges

    key = jax.random.PRNGKey(0)
    k_x, k_src, k_dst, k_w, k_b = jax.random.split(key, 5)

    # node features [N, H]
    x = jax.random.normal(k_x, (N, H), dtype=jnp.float32)

    # random edge_index [2, E]
    src = jax.random.randint(k_src, (E,), 0, N, dtype=jnp.int32)
    dst = jax.random.randint(k_dst, (E,), 0, N, dtype=jnp.int32)
    edge_index = jnp.stack([src, dst], axis=0)
    edge_weight = None

    # deterministic GCNConv parameters (glorot-ish init)
    w = jax.random.normal(k_w, (H, H), dtype=jnp.float32) * (1.0 / jnp.sqrt(H))
    b = jnp.zeros((H,), dtype=jnp.float32)

    # F.dropout(x, p=0.5, training=False) is the identity in eval mode.
    # TODO(synk): training-mode stochastic dropout (pltpu.prng_seed/prng_random_bits)
    # not implemented.
    a_norm = build_normalized_adjacency(edge_index, edge_weight, N)

    out = gcn_diff_forward(a_norm, x, w, b)
    out = jax.block_until_ready(out)
    assert out.shape == (N, H)

    # Reference mirroring the kernel's precision (bf16 operands, f32 accumulation).
    a_bf = a_norm.astype(jnp.bfloat16)
    x_bf = x.astype(jnp.bfloat16)
    w_bf = w.astype(jnp.bfloat16)
    xw_ref = jnp.dot(x_bf, w_bf, preferred_element_type=jnp.float32).astype(jnp.bfloat16)
    ref_bf = jnp.maximum(
        jnp.dot(a_bf, xw_ref, preferred_element_type=jnp.float32) + b[None, :], 0.0
    )
    assert jnp.allclose(out, ref_bf, atol=1e-2, rtol=1e-2)

    # Loose sanity check against the full-f32 reference semantics.
    ref_f32 = jnp.maximum(a_norm @ (x @ w) + b[None, :], 0.0)
    assert jnp.allclose(out, ref_f32, atol=1e-1, rtol=1e-1)

    print("KERNEL_OK")
</pallas_src>

<mosaic_0001>
module attributes {stable_mosaic.version = 11 : i64} {
  func.func @_linear_kernel(%arg0: i32, %arg1: memref<128x128xbf16, #tpu.memory_space<vmem>>, %arg2: memref<128x128xbf16, #tpu.memory_space<vmem>>, %arg3: memref<128x128xbf16, #tpu.memory_space<vmem>>) attributes {dimension_semantics = [#tpu.dimension_semantics<parallel>], iteration_bounds = array<i64: 1>, scalar_prefetch = 0 : i64, scratch_operands = 0 : i64, tpu.core_type = #tpu.core_type<tc>, window_params = [{transform_indices = @transform_0, window_bounds = array<i64: 128, 128>}, {pipeline_mode = #tpu.pipeline_mode<synchronous>, transform_indices = @transform_1, window_bounds = array<i64: 128, 128>}, {transform_indices = @transform_2, window_bounds = array<i64: 128, 128>}]} {
    %c0 = arith.constant 0 : index
    %c0_0 = arith.constant 0 : index
    %0 = vector.load %arg1[%c0, %c0_0] : memref<128x128xbf16, #tpu.memory_space<vmem>>, vector<128x128xbf16>
    %c0_1 = arith.constant 0 : index
    %c0_2 = arith.constant 0 : index
    %1 = vector.load %arg2[%c0_1, %c0_2] : memref<128x128xbf16, #tpu.memory_space<vmem>>, vector<128x128xbf16>
    %cst = arith.constant dense<0.000000e+00> : vector<128x128xf32>
    %2 = tpu.matmul %0, %1, %cst {dimension_numbers = #tpu.dot_dimension_numbers<[1], [0], [0], [1], [0, 0, 1, 1], [], []>} : vector<128x128xbf16>, vector<128x128xbf16>, vector<128x128xf32> -> vector<128x128xf32>
    %3 = arith.truncf %2 : vector<128x128xf32> to vector<128x128xbf16>
    %c0_3 = arith.constant 0 : index
    %c0_4 = arith.constant 0 : index
    %4 = vector.load %arg3[%c0_3, %c0_4] : memref<128x128xbf16, #tpu.memory_space<vmem>>, vector<128x128xbf16>
    tpu.vector_store %arg3[%c0_3, %c0_4], %3 {strides = array<i32>} : memref<128x128xbf16, #tpu.memory_space<vmem>>, vector<128x128xbf16>,
    return
  }
  func.func @transform_0(%arg0: i32) -> (i32, i32) {
    %c0_i32 = arith.constant 0 : i32
    %c0_i32_0 = arith.constant 0 : i32
    return %arg0, %c0_i32 : i32, i32
  }
  func.func @transform_1(%arg0: i32) -> (i32, i32) {
    %c0_i32 = arith.constant 0 : i32
    %c0_i32_0 = arith.constant 0 : i32
    %c0_i32_1 = arith.constant 0 : i32
    return %c0_i32, %c0_i32_0 : i32, i32
  }
  func.func @transform_2(%arg0: i32) -> (i32, i32) {
    %c0_i32 = arith.constant 0 : i32
    %c0_i32_0 = arith.constant 0 : i32
    return %arg0, %c0_i32 : i32, i32
  }
}

</mosaic_0001>

<llo_original>
// kernel: tpu_custom_call.1
$region0: #{tpu_custom_call.1}
  #allocation0 [shape = 'u32[]', space=smem, size = 0x4, offset = 0x4, fixed_abs, tag = 'smem constant byte address 0x4 - core index']
  #allocation1 [shape = 'u32[144,128]{1,0:T(1,128)}', space=vmem, size = 0x12000, scoped, tag = 'internal scratch']
  %s0 = inlined_call_operand.hbm [shape: bf16[128,128], index: 0, kind: input, shape index: {}]
  %s1 = inlined_call_operand.hbm [shape: bf16[128,128], index: 1, kind: input, shape index: {}]
  %s2 = inlined_call_operand.hbm [shape: bf16[128,128], index: 2, kind: output, shape index: {}]
  %s3 = sld [smem:[#allocation0]]
  $region26: #{tpu_custom_call.1} parent=0
    _
  %s5 = ssub.s32 1, %s3
  %s6 = scalar_select 0, %s5, %s3
  $region1: #{tpu_custom_call.1} parent=0
    #allocation2 [shape = 'u8[32768]{0}', space=vmem, size = 0x8000, scoped, tag = 'input window, operand 0, single buffered']
    #allocation3 [shape = 's32[1]{0}', space=sflag, size = 0x4, scoped, tag = 'scoped memory for tpu_custom_call.1']
    #allocation4 [shape = 's32[1]{0}', space=sflag, size = 0x4, scoped, tag = 'scoped memory for tpu_custom_call.1']
    #allocation5 [shape = 'u8[32768]{0}', space=vmem, size = 0x8000, scoped, tag = 'input window, operand 1, single buffered']
    #allocation6 [shape = 's32[1]{0}', space=sflag, size = 0x4, scoped, tag = 'scoped memory for tpu_custom_call.1']
    #allocation7 [shape = 'u8[32768]{0}', space=vmem, size = 0x8000, scoped, tag = 'output window, operand 0, single buffered']
    %7 = vsyncpa [#allocation3], 0
    %8 = vsyncpa [#allocation6], 0
    %9 = vsyncpa [#allocation4], 0
    // Predicated region
    $region2: #{tpu_custom_call.1} parent=1 // pred_check
      _
    $region3: #{tpu_custom_call.1} parent=1 // pred_check_branch
      %11 = sbr.rel (0) target = $region5
    $region4: #{tpu_custom_call.1} parent=1 // pred_region
      %s13 = ssub.s32 1024, 1024
      %14 = vsyncadd [#allocation3], %s13
      %s15 = sshll.u32 [#allocation2], 4
      %s16 = int_to_ptr.vmem [resolvable:$true] %s15
      %21 = dma.hbm_to_vmem [thread:$0]  %s0, 1024, %s16, [#allocation3], 64, 64, 4
    $region5: #{tpu_custom_call.1} parent=1 // pred_fallthru
      _
    // Predicated region
    $region6: #{tpu_custom_call.1} parent=1 // pred_check
      _
    $region7: #{tpu_custom_call.1} parent=1 // pred_check_branch
      %23 = sbr.rel (0) target = $region9
    $region8: #{tpu_custom_call.1} parent=1 // pred_region
      %s25 = ssub.s32 1024, 1024
      %26 = vsyncadd [#allocation6], %s25
      %s27 = sshll.u32 [#allocation5], 4
      %s28 = int_to_ptr.vmem [resolvable:$true] %s27
      %33 = dma.hbm_to_vmem [thread:$0]  %s1, 1024, %s28, [#allocation6], 64, 64, 4
    $region9: #{tpu_custom_call.1} parent=1 // pred_fallthru
      _
    // Predicated region
    $region10: #{tpu_custom_call.1} parent=1 // pred_check
      _
    $region11: #{tpu_custom_call.1} parent=1 // pred_check_branch
      %35 = sbr.rel (0) target = $region13
    $region12: #{tpu_custom_call.1} parent=1 // pred_region
      %36 = dma.done [#allocation3], 1024
    $region13: #{tpu_custom_call.1} parent=1 // pred_fallthru
      _
    // Predicated region
    $region14: #{tpu_custom_call.1} parent=1 // pred_check
      _
    $region15: #{tpu_custom_call.1} parent=1 // pred_check_branch
      %38 = sbr.rel (0) target = $region17
    $region16: #{tpu_custom_call.1} parent=1 // pred_region
      %39 = dma.done [#allocation6], 1024
    $region17: #{tpu_custom_call.1} parent=1 // pred_fallthru
      _
    %v41 = vld [vmem:[#allocation2] sm:$0xf]
    %v42 = vld [vmem:[#allocation2 + $0x4] sm:$0xf]
    %v43 = vld [vmem:[#allocation2 + $0x8] sm:$0xf]
    %v44 = vld [vmem:[#allocation2 + $0xc] sm:$0xf]
    %v45 = vld [vmem:[#allocation2 + $0x10] sm:$0xf]
    %v46 = vld [vmem:[#allocation2 + $0x14] sm:$0xf]
    %v47 = vld [vmem:[#allocation2 + $0x18] sm:$0xf]
    %v48 = vld [vmem:[#allocation2 + $0x1c] sm:$0xf]
    %v49 = vld [vmem:[#allocation2 + $0x20] sm:$0xf]
    %v50 = vld [vmem:[#allocation2 + $0x24] sm:$0xf]
    %v51 = vld [vmem:[#allocation2 + $0x28] sm:$0xf]
    %v52 = vld [vmem:[#allocation2 + $0x2c] sm:$0xf]
    %v53 = vld [vmem:[#allocation2 + $0x30] sm:$0xf]
    %v54 = vld [vmem:[#allocation2 + $0x34] sm:$0xf]
    %v55 = vld [vmem:[#allocation2 + $0x38] sm:$0xf]
    %v56 = vld [vmem:[#allocation2 + $0x3c] sm:$0xf]
    %v57 = vld [vmem:[#allocation5] sm:$0xf]
    %v58 = vld [vmem:[#allocation5 + $0x4] sm:$0xf]
    %v59 = vld [vmem:[#allocation5 + $0x8] sm:$0xf]
    %v60 = vld [vmem:[#allocation5 + $0xc] sm:$0xf]
    %v61 = vld [vmem:[#allocation5 + $0x10] sm:$0xf]
    %v62 = vld [vmem:[#allocation5 + $0x14] sm:$0xf]
    %v63 = vld [vmem:[#allocation5 + $0x18] sm:$0xf]
    %v64 = vld [vmem:[#allocation5 + $0x1c] sm:$0xf]
    %v65 = vld [vmem:[#allocation5 + $0x20] sm:$0xf]
    %v66 = vld [vmem:[#allocation5 + $0x24] sm:$0xf]
    %v67 = vld [vmem:[#allocation5 + $0x28] sm:$0xf]
    %v68 = vld [vmem:[#allocation5 + $0x2c] sm:$0xf]
    %v69 = vld [vmem:[#allocation5 + $0x30] sm:$0xf]
    %v70 = vld [vmem:[#allocation5 + $0x34] sm:$0xf]
    %v71 = vld [vmem:[#allocation5 + $0x38] sm:$0xf]
    %v72 = vld [vmem:[#allocation5 + $0x3c] sm:$0xf]
    %v89 = vunpack.c.l.b16 %v41
    %v90 = vunpack.c.l.b16 %v42
    %v91 = vunpack.c.l.b16 %v43
    %v92 = vunpack.c.l.b16 %v44
    %v93 = vunpack.c.l.b16 %v45
    %v94 = vunpack.c.l.b16 %v46
    %v95 = vunpack.c.l.b16 %v47
    %v96 = vunpack.c.l.b16 %v48
    %v97 = vunpack.c.l.b16 %v49
    %v98 = vunpack.c.l.b16 %v50
    %v99 = vunpack.c.l.b16 %v51
    %v100 = vunpack.c.l.b16 %v52
    %v101 = vunpack.c.l.b16 %v53
    %v102 = vunpack.c.l.b16 %v54
    %v103 = vunpack.c.l.b16 %v55
    %v104 = vunpack.c.l.b16 %v56
    %v105 = vpack.c.b16 %v90, %v89
    %v106 = vpack.c.b16 %v92, %v91
    %v107 = vpack.c.b16 %v94, %v93
    %v108 = vpack.c.b16 %v96, %v95
    %v109 = vpack.c.b16 %v98, %v97
    %v110 = vpack.c.b16 %v100, %v99
    %v111 = vpack.c.b16 %v102, %v101
    %v112 = vpack.c.b16 %v104, %v103
    %v137 = vunpack.c.l.b16 %v57
    %v138 = vunpack.c.l.b16 %v58
    %v139 = vunpack.c.l.b16 %v59
    %v140 = vunpack.c.l.b16 %v60
    %v141 = vunpack.c.l.b16 %v61
    %v142 = vunpack.c.l.b16 %v62
    %v143 = vunpack.c.l.b16 %v63
    %v144 = vunpack.c.l.b16 %v64
    %v145 = vunpack.c.l.b16 %v65
    %v146 = vunpack.c.l.b16 %v66
    %v147 = vunpack.c.l.b16 %v67
    %v148 = vunpack.c.l.b16 %v68
    %v149 = vunpack.c.l.b16 %v69
    %v150 = vunpack.c.l.b16 %v70
    %v151 = vunpack.c.l.b16 %v71
    %v152 = vunpack.c.l.b16 %v72
    %v153 = vpack.c.b16 %v138, %v137
    %v154 = vpack.c.b16 %v140, %v139
    %v155 = vpack.c.b16 %v142, %v141
    %v156 = vpack.c.b16 %v144, %v143
    %v157 = vpack.c.b16 %v146, %v145
    %v158 = vpack.c.b16 %v148, %v147
    %v159 = vpack.c.b16 %v150, %v149
    %v160 = vpack.c.b16 %v152, %v151
    %169 = vmatprep.subr.bf16.mxu0 0
    %170 = vmatpush1.bf16.msra.mxu0 %v153
    %171 = vmatprep.subr.bf16.mxu0 0
    %172 = vmatpush1.bf16.msra.mxu0 %v154
    %173 = vmatprep.subr.bf16.mxu0 0
    %174 = vmatpush1.bf16.msra.mxu0 %v155
    %175 = vmatprep.subr.bf16.mxu0 0
    %176 = vmatpush1.bf16.msra.mxu0 %v156
    %177 = vmatprep.subr.bf16.mxu0 0
    %178 = vmatpush1.bf16.msra.mxu0 %v157
    %179 = vmatprep.subr.bf16.mxu0 0
    %180 = vmatpush1.bf16.msra.mxu0 %v158
    %181 = vmatprep.subr.bf16.mxu0 0
    %182 = vmatpush1.bf16.msra.mxu0 %v159
    %183 = vmatprep.subr.bf16.mxu0 0
    %184 = vmatpush1.bf16.msra.mxu0 %v160
    %185 = vmatprep.subr.bf16.mxu0 0
    %186 = vmatpush1.bf16.msra.mxu0 0
    %187 = vmatprep.subr.bf16.mxu0 0
    %188 = vmatpush1.bf16.msra.mxu0 0
    %189 = vmatprep.subr.bf16.mxu0 0
    %190 = vmatpush1.bf16.msra.mxu0 0
    %191 = vmatprep.subr.bf16.mxu0 0
    %192 = vmatpush1.bf16.msra.mxu0 0
    %193 = vmatprep.subr.bf16.mxu0 0
    %194 = vmatpush1.bf16.msra.mxu0 0
    %195 = vmatprep.subr.bf16.mxu0 0
    %196 = vmatpush1.bf16.msra.mxu0 0
    %197 = vmatprep.subr.bf16.mxu0 0
    %198 = vmatpush1.bf16.msra.mxu0 0
    %199 = vmatprep.subr.bf16.mxu0 0
    %200 = vmatpush1.bf16.msra.mxu0 0
    %201 = vmatprep.mubr.bf16.mxu0 0
    %202 = vmatmul.mubr.bf16.gmra.mrb[0].mxu0 %v105
    %v203 = vpop.f32.mrb[0].mxu0
    %v204 = vadd.f32 0.0, %v203
    %v205 = vpop.f32.mrb[0].mxu0
    %v206 = vpop.f32.mrb[0].mxu0
    %v207 = vadd.f32 0.0, %v206
    %v208 = vpop.f32.mrb[0].mxu0
    %209 = vmatprep.mubr.bf16.mxu0 0
    %210 = vmatmul.mubr.bf16.gmra.mrb[0].mxu0 %v106
    %v211 = vpop.f32.mrb[0].mxu0
    %v212 = vadd.f32 0.0, %v211
    %v213 = vpop.f32.mrb[0].mxu0
    %v214 = vpop.f32.mrb[0].mxu0
    %v215 = vadd.f32 0.0, %v214
    %v216 = vpop.f32.mrb[0].mxu0
    %217 = vmatprep.mubr.bf16.mxu0 0
    %218 = vmatmul.mubr.bf16.gmra.mrb[0].mxu0 %v107
    %v219 = vpop.f32.mrb[0].mxu0
    %v220 = vadd.f32 0.0, %v219
    %v221 = vpop.f32.mrb[0].mxu0
    %v222 = vpop.f32.mrb[0].mxu0
    %v223 = vadd.f32 0.0, %v222
    %v224 = vpop.f32.mrb[0].mxu0
    %225 = vmatprep.mubr.bf16.mxu0 0
    %226 = vmatmul.mubr.bf16.gmra.mrb[0].mxu0 %v108
    %v227 = vpop.f32.mrb[0].mxu0
    %v228 = vadd.f32 0.0, %v227
    %v229 = vpop.f32.mrb[0].mxu0
    %v230 = vpop.f32.mrb[0].mxu0
    %v231 = vadd.f32 0.0, %v230
    %v232 = vpop.f32.mrb[0].mxu0
    %233 = vmatprep.mubr.bf16.mxu0 0
    %234 = vmatmul.mubr.bf16.gmra.mrb[0].mxu0 %v109
    %v235 = vpop.f32.mrb[0].mxu0
    %v236 = vadd.f32 0.0, %v235
    %v237 = vpop.f32.mrb[0].mxu0
    %v238 = vpop.f32.mrb[0].mxu0
    %v239 = vadd.f32 0.0, %v238
    %v240 = vpop.f32.mrb[0].mxu0
    %241 = vmatprep.mubr.bf16.mxu0 0
    %242 = vmatmul.mubr.bf16.gmra.mrb[0].mxu0 %v110
    %v243 = vpop.f32.mrb[0].mxu0
    %v244 = vadd.f32 0.0, %v243
    %v245 = vpop.f32.mrb[0].mxu0
    %v246 = vpop.f32.mrb[0].mxu0
    %v247 = vadd.f32 0.0, %v246
    %v248 = vpop.f32.mrb[0].mxu0
    %249 = vmatprep.mubr.bf16.mxu0 0
    %250 = vmatmul.mubr.bf16.gmra.mrb[0].mxu0 %v111
    %v251 = vpop.f32.mrb[0].mxu0
    %v252 = vadd.f32 0.0, %v251
    %v253 = vpop.f32.mrb[0].mxu0
    %v254 = vpop.f32.mrb[0].mxu0
    %v255 = vadd.f32 0.0, %v254
    %v256 = vpop.f32.mrb[0].mxu0
    %257 = vmatprep.mubr.bf16.mxu0 0
    %258 = vmatmul.mubr.bf16.gmra.mrb[0].mxu0 %v112
    %v259 = vpop.f32.mrb[0].mxu0
    %v260 = vadd.f32 0.0, %v259
    %v261 = vpop.f32.mrb[0].mxu0
    %v262 = vpop.f32.mrb[0].mxu0
    %v263 = vadd.f32 0.0, %v262
    %v264 = vpop.f32.mrb[0].mxu0
    %265 = vdwg.mxu0
    %v266 = vpack.c.bf16 %v207, %v204
    %v267 = vpack.c.bf16 %v215, %v212
    %v268 = vpack.c.bf16 %v223, %v220
    %v269 = vpack.c.bf16 %v231, %v228
    %v270 = vpack.c.bf16 %v239, %v236
    %v271 = vpack.c.bf16 %v247, %v244
    %v272 = vpack.c.bf16 %v255, %v252
    %v273 = vpack.c.bf16 %v263, %v260
    %v282 = vunpack.c.l.b16 %v266
    %v283 = vunpack.c.h.b16 %v266
    %v284 = vunpack.c.l.b16 %v267
    %v285 = vunpack.c.h.b16 %v267
    %v286 = vunpack.c.l.b16 %v268
    %v287 = vunpack.c.h.b16 %v268
    %v288 = vunpack.c.l.b16 %v269
    %v289 = vunpack.c.h.b16 %v269
    %v290 = vunpack.c.l.b16 %v270
    %v291 = vunpack.c.h.b16 %v270
    %v292 = vunpack.c.l.b16 %v271
    %v293 = vunpack.c.h.b16 %v271
    %v294 = vunpack.c.l.b16 %v272
    %v295 = vunpack.c.h.b16 %v272
    %v296 = vunpack.c.l.b16 %v273
    %v297 = vunpack.c.h.b16 %v273
    %v298 = vpack.c.b16 %v282, %v282
    %v299 = vpack.c.b16 %v283, %v283
    %v300 = vpack.c.b16 %v284, %v284
    %v301 = vpack.c.b16 %v285, %v285
    %v302 = vpack.c.b16 %v286, %v286
    %v303 = vpack.c.b16 %v287, %v287
    %v304 = vpack.c.b16 %v288, %v288
    %v305 = vpack.c.b16 %v289, %v289
    %v306 = vpack.c.b16 %v290, %v290
    %v307 = vpack.c.b16 %v291, %v291
    %v308 = vpack.c.b16 %v292, %v292
    %v309 = vpack.c.b16 %v293, %v293
    %v310 = vpack.c.b16 %v294, %v294
    %v311 = vpack.c.b16 %v295, %v295
    %v312 = vpack.c.b16 %v296, %v296
    %v313 = vpack.c.b16 %v297, %v297
    %330 = vst [vmem:[#allocation7] sm:$0xf] %v298
    %331 = vst [vmem:[#allocation7 + $0x4] sm:$0xf] %v299
    %332 = vst [vmem:[#allocation7 + $0x8] sm:$0xf] %v300
    %333 = vst [vmem:[#allocation7 + $0xc] sm:$0xf] %v301
    %334 = vst [vmem:[#allocation7 + $0x10] sm:$0xf] %v302
    %335 = vst [vmem:[#allocation7 + $0x14] sm:$0xf] %v303
    %336 = vst [vmem:[#allocation7 + $0x18] sm:$0xf] %v304
    %337 = vst [vmem:[#allocation7 + $0x1c] sm:$0xf] %v305
    %338 = vst [vmem:[#allocation7 + $0x20] sm:$0xf] %v306
    %339 = vst [vmem:[#allocation7 + $0x24] sm:$0xf] %v307
    %340 = vst [vmem:[#allocation7 + $0x28] sm:$0xf] %v308
    %341 = vst [vmem:[#allocation7 + $0x2c] sm:$0xf] %v309
    %342 = vst [vmem:[#allocation7 + $0x30] sm:$0xf] %v310
    %343 = vst [vmem:[#allocation7 + $0x34] sm:$0xf] %v311
    %344 = vst [vmem:[#allocation7 + $0x38] sm:$0xf] %v312
    %345 = vst [vmem:[#allocation7 + $0x3c] sm:$0xf] %v313
    // Predicated region
    $region18: #{tpu_custom_call.1} parent=1 // pred_check
      _
    $region19: #{tpu_custom_call.1} parent=1 // pred_check_branch
      %347 = sbr.rel (0) target = $region21
    $region20: #{tpu_custom_call.1} parent=1 // pred_region
      %s349 = ssub.s32 1024, 1024
      %350 = vsyncadd [#allocation4], %s349
      %s351 = sshll.u32 [#allocation7], 4
      %s352 = int_to_ptr.vmem [resolvable:$true] %s351
      %357 = dma.vmem_to_hbm [thread:$0]  %s352, 1024, %s2, [#allocation4], 64, 64, 4
    $region21: #{tpu_custom_call.1} parent=1 // pred_fallthru
      _
    // Predicated region
    $region22: #{tpu_custom_call.1} parent=1 // pred_check
      _
    $region23: #{tpu_custom_call.1} parent=1 // pred_check_branch
      %359 = sbr.rel (0) target = $region25
    $region24: #{tpu_custom_call.1} parent=1 // pred_region
      %360 = dma.done [#allocation4], 1024
    $region25: #{tpu_custom_call.1} parent=1 // pred_fallthru
      _
    %361 = vsyncpa [#allocation3], 1
    %362 = vsyncpa [#allocation6], 1
    %363 = vsyncpa [#allocation4], 1

</llo_original>
